<compile_context>
chip_gen: v6e
topology: v6e:2x2x1
jax: 0.10.0
libtpu: 0.0.40
codegen_flags: <defaults>
</compile_context>

<pallas_src>
import functools

import jax
import jax.numpy as jnp
from jax.experimental import pallas as pl
from jax.experimental.pallas import tpu as pltpu


def generator_kernel(x_ref, w1_ref, b1_ref, w2_ref, b2_ref, out_ref):
    # hidden = relu(x @ W1 + b1); bf16 MXU operands, f32 accumulation.
    x = x_ref[...].astype(jnp.bfloat16)                      # cast in-kernel (free VPU work)
    h = jnp.dot(x, w1_ref[...], preferred_element_type=jnp.float32)
    h = jnp.maximum(h + b1_ref[...], 0.0)
    # out = sigmoid(h @ W2 + b2)
    logits = jnp.dot(h.astype(jnp.bfloat16), w2_ref[...],
                     preferred_element_type=jnp.float32)
    out_ref[...] = jax.nn.sigmoid(logits + b2_ref[...]).astype(out_ref.dtype)


def _round_up(n, m):
    return ((n + m - 1) // m) * m


def _pad2(a, shape):
    """Zero-pad a 2D array up to `shape`."""
    pr = shape[0] - a.shape[0]
    pc = shape[1] - a.shape[1]
    if pr == 0 and pc == 0:
        return a
    return jnp.pad(a, ((0, pr), (0, pc)))


def _num_tensorcores_per_chip():
    """2 TensorCores on v7x, 1 on v5e/v6e. Conservative fallback = 1."""
    try:
        kind = jax.devices()[0].device_kind.lower()
    except Exception:
        return 1
    return 2 if ("v7" in kind or "7x" in kind) else 1


def _choose_batch_tiling(batch):
    """Pick (tile_m, num_blocks, padded_batch).

    grid collapses to 1 on single-TC chips (no per-step overhead); >=2
    parallel blocks on dual-TC v7x. tm is capped so the x/out tiles stay well
    under the v7x 64 MiB VMEM even for large batches.
    """
    cores = _num_tensorcores_per_chip()
    tm_cap = 2048
    tm = _round_up(pl.cdiv(batch, cores), 16)   # mult of 16: safe for bf16/f32 sublanes
    tm = min(tm, tm_cap)
    nblk = pl.cdiv(batch, tm)
    return tm, nblk, tm * nblk


def prepare_generator_params(w1, b1, w2, b2):
    """One-time (init-level) padding + dtype prep of the static parameters.

    Only the *output* feature dims (hidden, image_size) are padded to 128
    lanes; the contraction dim K = z_dim is left at its natural size.
    Weights go to bf16 (MXU dtype), biases stay f32 (added to the f32 acc).
    """
    z_dim, hidden = w1.shape
    image_size = w2.shape[1]
    hp = _round_up(max(hidden, 1), 128)
    ip = _round_up(max(image_size, 1), 128)
    w1p = _pad2(w1, (z_dim, hp)).astype(jnp.bfloat16)
    b1p = _pad2(b1.reshape(1, -1), (1, hp)).astype(jnp.float32)
    w2p = _pad2(w2, (hp, ip)).astype(jnp.bfloat16)
    b2p = _pad2(b2.reshape(1, -1), (1, ip)).astype(jnp.float32)
    return w1p, b1p, w2p, b2p


def generator_forward(x, w1p, b1p, w2p, b2p, *, image_size,
                      out_dtype=jnp.bfloat16):
    """x: (B, z_dim) f32. w1p/b1p/w2p/b2p: outputs of prepare_generator_params.

    Returns (B, image_size) in `out_dtype` (bf16 by default to halve the
    output HBM stream; pass jnp.float32 if downstream strictly needs f32).
    """
    batch, z_dim = x.shape
    hp = w1p.shape[1]
    ip = w2p.shape[1]

    tm, nblk, bp = _choose_batch_tiling(batch)
    xp = x if bp == batch else jnp.pad(x, ((0, bp - batch), (0, 0)))

    out_itemsize = jnp.dtype(out_dtype).itemsize
    cost = pl.CostEstimate(
        flops=2 * bp * (z_dim * hp + hp * ip),
        transcendentals=bp * ip,                       # sigmoid -> EUP exp
        bytes_accessed=(xp.size * xp.dtype.itemsize
                        + w1p.size * w1p.dtype.itemsize
                        + b1p.size * b1p.dtype.itemsize
                        + w2p.size * w2p.dtype.itemsize
                        + b2p.size * b2p.dtype.itemsize
                        + bp * ip * out_itemsize))

    out_padded = pl.pallas_call(
        generator_kernel,
        out_shape=jax.ShapeDtypeStruct((bp, ip), out_dtype),
        grid=(nblk,),
        in_specs=[
            pl.BlockSpec((tm, z_dim), lambda i: (i, 0)),  # x tile (K unpadded)
            pl.BlockSpec((z_dim, hp), lambda i: (0, 0)),  # W1 (resident)
            pl.BlockSpec((1, hp), lambda i: (0, 0)),      # b1 (resident)
            pl.BlockSpec((hp, ip), lambda i: (0, 0)),     # W2 (resident)
            pl.BlockSpec((1, ip), lambda i: (0, 0)),      # b2 (resident)
        ],
        out_specs=pl.BlockSpec((tm, ip), lambda i: (i, 0)),
        compiler_params=pltpu.CompilerParams(
            dimension_semantics=("parallel",)),
        cost_estimate=cost,
    )(xp, w1p, b1p, w2p, b2p)

    # Strip batch padding and padded output columns (sigmoid(0)=0.5).
    # Under jit this slice fuses with the kernel's consumer instead of being
    # a standalone HBM copy.
    return out_padded[:batch, :image_size]


def init_generator_params(key, image_size, hidden_dim, z_dim):
    """Deterministic synthetic init mirroring nn.Linear shapes (pre-transposed to (in, out))."""
    k1, k2, k3, k4 = jax.random.split(key, 4)
    w1 = jax.random.normal(k1, (z_dim, hidden_dim), jnp.float32) * 0.1
    b1 = jax.random.normal(k2, (1, hidden_dim), jnp.float32) * 0.1
    w2 = jax.random.normal(k3, (hidden_dim, image_size), jnp.float32) * 0.1
    b2 = jax.random.normal(k4, (1, image_size), jnp.float32) * 0.1
    return w1, b1, w2, b2


if __name__ == "__main__":
    # Small logical shapes implied by the module; batch chosen so the v7x path
    # gets two parallel blocks while v5e/v6e collapse to a single grid step.
    batch = 256
    z_dim = 16
    hidden_dim = 32
    image_size = 64

    key = jax.random.PRNGKey(0)
    kx, kp = jax.random.split(key)
    x = jax.random.normal(kx, (batch, z_dim), jnp.float32)
    w1, b1, w2, b2 = init_generator_params(kp, image_size, hidden_dim, z_dim)

    # One-time parameter prep (pad hidden/image dims to 128 lanes, cast weights to bf16).
    params = prepare_generator_params(w1, b1, w2, b2)
    params = jax.block_until_ready(params)
    w1p, b1p, w2p, b2p = params

    fwd = jax.jit(functools.partial(generator_forward, image_size=image_size))
    out = fwd(x, w1p, b1p, w2p, b2p)
    out = jax.block_until_ready(out)

    # Reference in plain f32 JAX (same math as the PyTorch forward pass).
    ref = jax.nn.sigmoid(jnp.maximum(x @ w1 + b1, 0.0) @ w2 + b2)
    assert out.shape == (batch, image_size)
    assert out.dtype == jnp.bfloat16
    err = float(jnp.max(jnp.abs(out.astype(jnp.float32) - ref)))
    # bf16 matmul operands / bf16 output (f32 accumulation) -> loosened tolerance.
    assert err < 2e-2, err

    print("KERNEL_OK")
</pallas_src>

<mosaic_0001>
module attributes {stable_mosaic.version = 11 : i64} {
  func.func @generator_kernel(%arg0: i32, %arg1: memref<256x16xf32, #tpu.memory_space<vmem>>, %arg2: memref<16x128xbf16, #tpu.memory_space<vmem>>, %arg3: memref<1x128xf32, #tpu.memory_space<vmem>>, %arg4: memref<128x128xbf16, #tpu.memory_space<vmem>>, %arg5: memref<1x128xf32, #tpu.memory_space<vmem>>, %arg6: memref<256x128xbf16, #tpu.memory_space<vmem>>) attributes {dimension_semantics = [#tpu.dimension_semantics<parallel>], iteration_bounds = array<i64: 1>, scalar_prefetch = 0 : i64, scratch_operands = 0 : i64, tpu.core_type = #tpu.core_type<tc>, window_params = [{transform_indices = @transform_0, window_bounds = array<i64: 256, 16>}, {pipeline_mode = #tpu.pipeline_mode<synchronous>, transform_indices = @transform_1, window_bounds = array<i64: 16, 128>}, {pipeline_mode = #tpu.pipeline_mode<synchronous>, transform_indices = @transform_2, window_bounds = array<i64: 1, 128>}, {pipeline_mode = #tpu.pipeline_mode<synchronous>, transform_indices = @transform_3, window_bounds = array<i64: 128, 128>}, {pipeline_mode = #tpu.pipeline_mode<synchronous>, transform_indices = @transform_4, window_bounds = array<i64: 1, 128>}, {transform_indices = @transform_5, window_bounds = array<i64: 256, 128>}]} {
    %c0 = arith.constant 0 : index
    %c0_0 = arith.constant 0 : index
    %0 = vector.load %arg1[%c0, %c0_0] : memref<256x16xf32, #tpu.memory_space<vmem>>, vector<256x16xf32>
    %1 = arith.truncf %0 : vector<256x16xf32> to vector<256x16xbf16>
    %c0_1 = arith.constant 0 : index
    %c0_2 = arith.constant 0 : index
    %2 = vector.load %arg2[%c0_1, %c0_2] : memref<16x128xbf16, #tpu.memory_space<vmem>>, vector<16x128xbf16>
    %cst = arith.constant dense<0.000000e+00> : vector<256x128xf32>
    %3 = tpu.matmul %1, %2, %cst {dimension_numbers = #tpu.dot_dimension_numbers<[1], [0], [0], [1], [0, 0, 1, 1], [], []>} : vector<256x16xbf16>, vector<16x128xbf16>, vector<256x128xf32> -> vector<256x128xf32>
    %c0_3 = arith.constant 0 : index
    %c0_4 = arith.constant 0 : index
    %4 = vector.load %arg3[%c0_3, %c0_4] : memref<1x128xf32, #tpu.memory_space<vmem>>, vector<1x128xf32>
    %5 = vector.broadcast %4 : vector<1x128xf32> to vector<256x128xf32>
    %6 = arith.addf %3, %5 : vector<256x128xf32>
    %cst_5 = arith.constant 0.000000e+00 : f32
    %7 = vector.broadcast %cst_5 : f32 to vector<256x128xf32>
    %8 = arith.maximumf %6, %7 : vector<256x128xf32>
    %9 = arith.truncf %8 : vector<256x128xf32> to vector<256x128xbf16>
    %c0_6 = arith.constant 0 : index
    %c0_7 = arith.constant 0 : index
    %10 = vector.load %arg4[%c0_6, %c0_7] : memref<128x128xbf16, #tpu.memory_space<vmem>>, vector<128x128xbf16>
    %cst_8 = arith.constant dense<0.000000e+00> : vector<256x128xf32>
    %11 = tpu.matmul %9, %10, %cst_8 {dimension_numbers = #tpu.dot_dimension_numbers<[1], [0], [0], [1], [0, 0, 1, 1], [], []>} : vector<256x128xbf16>, vector<128x128xbf16>, vector<256x128xf32> -> vector<256x128xf32>
    %c0_9 = arith.constant 0 : index
    %c0_10 = arith.constant 0 : index
    %12 = vector.load %arg5[%c0_9, %c0_10] : memref<1x128xf32, #tpu.memory_space<vmem>>, vector<1x128xf32>
    %13 = vector.broadcast %12 : vector<1x128xf32> to vector<256x128xf32>
    %14 = arith.addf %11, %13 : vector<256x128xf32>
    %15 = arith.negf %14 : vector<256x128xf32>
    %16 = math.exp %15 : vector<256x128xf32>
    %cst_11 = arith.constant 1.000000e+00 : f32
    %17 = vector.broadcast %cst_11 : f32 to vector<256x128xf32>
    %18 = arith.addf %17, %16 : vector<256x128xf32>
    %19 = arith.divf %17, %18 : vector<256x128xf32>
    %20 = arith.truncf %19 : vector<256x128xf32> to vector<256x128xbf16>
    %c0_12 = arith.constant 0 : index
    %c0_13 = arith.constant 0 : index
    %21 = vector.load %arg6[%c0_12, %c0_13] : memref<256x128xbf16, #tpu.memory_space<vmem>>, vector<256x128xbf16>
    tpu.vector_store %arg6[%c0_12, %c0_13], %20 {strides = array<i32>} : memref<256x128xbf16, #tpu.memory_space<vmem>>, vector<256x128xbf16>,
    return
  }
  func.func @transform_0(%arg0: i32) -> (i32, i32) {
    %c0_i32 = arith.constant 0 : i32
    %c0_i32_0 = arith.constant 0 : i32
    return %arg0, %c0_i32 : i32, i32
  }
  func.func @transform_1(%arg0: i32) -> (i32, i32) {
    %c0_i32 = arith.constant 0 : i32
    %c0_i32_0 = arith.constant 0 : i32
    %c0_i32_1 = arith.constant 0 : i32
    return %c0_i32, %c0_i32_0 : i32, i32
  }
  func.func @transform_2(%arg0: i32) -> (i32, i32) {
    %c0_i32 = arith.constant 0 : i32
    %c0_i32_0 = arith.constant 0 : i32
    %c0_i32_1 = arith.constant 0 : i32
    return %c0_i32, %c0_i32_0 : i32, i32
  }
  func.func @transform_3(%arg0: i32) -> (i32, i32) {
    %c0_i32 = arith.constant 0 : i32
    %c0_i32_0 = arith.constant 0 : i32
    %c0_i32_1 = arith.constant 0 : i32
    return %c0_i32, %c0_i32_0 : i32, i32
  }
  func.func @transform_4(%arg0: i32) -> (i32, i32) {
    %c0_i32 = arith.constant 0 : i32
    %c0_i32_0 = arith.constant 0 : i32
    %c0_i32_1 = arith.constant 0 : i32
    return %c0_i32, %c0_i32_0 : i32, i32
  }
  func.func @transform_5(%arg0: i32) -> (i32, i32) {
    %c0_i32 = arith.constant 0 : i32
    %c0_i32_0 = arith.constant 0 : i32
    return %arg0, %c0_i32 : i32, i32
  }
}

</mosaic_0001>

<llo_original>
// kernel: generator_forward.1
$region0: #{generator_forward.1}
  #allocation0 [shape = 'u32[]', space=smem, size = 0x4, offset = 0x4, fixed_abs, tag = 'smem constant byte address 0x4 - core index']
  #allocation1 [shape = 'u32[144,128]{1,0:T(1,128)}', space=vmem, size = 0x12000, scoped, tag = 'internal scratch']
  %s0 = inlined_call_operand.vmem [shape: f32[256,16], index: 0, kind: input, shape index: {}]
  %s1 = inlined_call_operand.vmem [shape: bf16[16,128], index: 1, kind: input, shape index: {}]
  %s2 = inlined_call_operand.vmem [shape: f32[1,128], index: 2, kind: input, shape index: {}]
  %s3 = inlined_call_operand.vmem [shape: bf16[128,128], index: 3, kind: input, shape index: {}]
  %s4 = inlined_call_operand.vmem [shape: f32[1,128], index: 4, kind: input, shape index: {}]
  %s5 = inlined_call_operand.vmem [shape: bf16[256,128], index: 5, kind: output, shape index: {}]
  %s6 = sld [smem:[#allocation0]]
  $region30: #{generator_forward.1} parent=0
    _
  %s8 = ssub.s32 1, %s6
  %s9 = scalar_select 0, %s8, %s6
  // Predicated region
  $region2: #{generator_forward.1} parent=0 // pred_check
    _
  $region3: #{generator_forward.1} parent=0 // pred_check_branch
    %11 = sbr.rel (0) target = $region5
  $region4: #{generator_forward.1} parent=0 // pred_region
    _
  $region5: #{generator_forward.1} parent=0 // pred_fallthru
    _
  // Predicated region
  $region6: #{generator_forward.1} parent=0 // pred_check
    _
  $region7: #{generator_forward.1} parent=0 // pred_check_branch
    %13 = sbr.rel (0) target = $region9
  $region8: #{generator_forward.1} parent=0 // pred_region
    _
  $region9: #{generator_forward.1} parent=0 // pred_fallthru
    _
  // Predicated region
  $region10: #{generator_forward.1} parent=0 // pred_check
    _
  $region11: #{generator_forward.1} parent=0 // pred_check_branch
    %15 = sbr.rel (0) target = $region13
  $region12: #{generator_forward.1} parent=0 // pred_region
    _
  $region13: #{generator_forward.1} parent=0 // pred_fallthru
    _
  // Predicated region
  $region14: #{generator_forward.1} parent=0 // pred_check
    _
  $region15: #{generator_forward.1} parent=0 // pred_check_branch
    %17 = sbr.rel (0) target = $region17
  $region16: #{generator_forward.1} parent=0 // pred_region
    _
  $region17: #{generator_forward.1} parent=0 // pred_fallthru
    _
  // Predicated region
  $region18: #{generator_forward.1} parent=0 // pred_check
    _
  $region19: #{generator_forward.1} parent=0 // pred_check_branch
    %19 = sbr.rel (0) target = $region21
  $region20: #{generator_forward.1} parent=0 // pred_region
    _
  $region21: #{generator_forward.1} parent=0 // pred_fallthru
    _
  %v21 = vld [vmem:[%s0] sm:$0xff]
  %v22 = vld [vmem:[%s0 + $0x8] sm:$0xff]
  %v23 = vld [vmem:[%s0 + $0x10] sm:$0xff]
  %v24 = vld [vmem:[%s0 + $0x18] sm:$0xff]
  %v25 = vld [vmem:[%s0 + $0x20] sm:$0xff]
  %v26 = vld [vmem:[%s0 + $0x28] sm:$0xff]
  %v27 = vld [vmem:[%s0 + $0x30] sm:$0xff]
  %v28 = vld [vmem:[%s0 + $0x38] sm:$0xff]
  %v29 = vld [vmem:[%s0 + $0x40] sm:$0xff]
  %v30 = vld [vmem:[%s0 + $0x48] sm:$0xff]
  %v31 = vld [vmem:[%s0 + $0x50] sm:$0xff]
  %v32 = vld [vmem:[%s0 + $0x58] sm:$0xff]
  %v33 = vld [vmem:[%s0 + $0x60] sm:$0xff]
  %v34 = vld [vmem:[%s0 + $0x68] sm:$0xff]
  %v35 = vld [vmem:[%s0 + $0x70] sm:$0xff]
  %v36 = vld [vmem:[%s0 + $0x78] sm:$0xff]
  %v37 = vld [vmem:[%s0 + $0x80] sm:$0xff]
  %v38 = vld [vmem:[%s0 + $0x88] sm:$0xff]
  %v39 = vld [vmem:[%s0 + $0x90] sm:$0xff]
  %v40 = vld [vmem:[%s0 + $0x98] sm:$0xff]
  %v41 = vld [vmem:[%s0 + $0xa0] sm:$0xff]
  %v42 = vld [vmem:[%s0 + $0xa8] sm:$0xff]
  %v43 = vld [vmem:[%s0 + $0xb0] sm:$0xff]
  %v44 = vld [vmem:[%s0 + $0xb8] sm:$0xff]
  %v45 = vld [vmem:[%s0 + $0xc0] sm:$0xff]
  %v46 = vld [vmem:[%s0 + $0xc8] sm:$0xff]
  %v47 = vld [vmem:[%s0 + $0xd0] sm:$0xff]
  %v48 = vld [vmem:[%s0 + $0xd8] sm:$0xff]
  %v49 = vld [vmem:[%s0 + $0xe0] sm:$0xff]
  %v50 = vld [vmem:[%s0 + $0xe8] sm:$0xff]
  %v51 = vld [vmem:[%s0 + $0xf0] sm:$0xff]
  %v52 = vld [vmem:[%s0 + $0xf8] sm:$0xff]
  %v53 = vpack.c.bf16 %v22, %v21
  %v54 = vpack.c.bf16 %v24, %v23
  %v55 = vpack.c.bf16 %v26, %v25
  %v56 = vpack.c.bf16 %v28, %v27
  %v57 = vpack.c.bf16 %v30, %v29
  %v58 = vpack.c.bf16 %v32, %v31
  %v59 = vpack.c.bf16 %v34, %v33
  %v60 = vpack.c.bf16 %v36, %v35
  %v61 = vpack.c.bf16 %v38, %v37
  %v62 = vpack.c.bf16 %v40, %v39
  %v63 = vpack.c.bf16 %v42, %v41
  %v64 = vpack.c.bf16 %v44, %v43
  %v65 = vpack.c.bf16 %v46, %v45
  %v66 = vpack.c.bf16 %v48, %v47
  %v67 = vpack.c.bf16 %v50, %v49
  %v68 = vpack.c.bf16 %v52, %v51
  %v69 = vld [vmem:[%s1] sm:$0xf]
  %v70 = vld [vmem:[%s1 + $0x4] sm:$0xf]
  %v71 = vld [vmem:[%s2] sm:$0x1]
  %v73 = vlaneseq
  %v74 = vshrl.u32 %v73, 7
  %v75 = vsub.s32 0, %v74
  %v76 = vrot.slane %v71, %v75
  %v80 = vunpack.c.l.b16 %v69
  %v81 = vunpack.c.l.b16 %v70
  %v82 = vpack.c.b16 %v81, %v80
  %vm84 = vcmask 130048
  %v86 = vsel %vm84, %v53, 0
  %v89 = vsel %vm84, %v54, 0
  %v92 = vsel %vm84, %v55, 0
  %v95 = vsel %vm84, %v56, 0
  %v98 = vsel %vm84, %v57, 0
  %v101 = vsel %vm84, %v58, 0
  %v104 = vsel %vm84, %v59, 0
  %v107 = vsel %vm84, %v60, 0
  %v110 = vsel %vm84, %v61, 0
  %v113 = vsel %vm84, %v62, 0
  %v116 = vsel %vm84, %v63, 0
  %v119 = vsel %vm84, %v64, 0
  %v122 = vsel %vm84, %v65, 0
  %v125 = vsel %vm84, %v66, 0
  %v128 = vsel %vm84, %v67, 0
  %v131 = vsel %vm84, %v68, 0
  %133 = vmatprep.subr.bf16.mxu0 0
  %134 = vmatpush1.bf16.msra.mxu0 0
  %135 = vmatprep.subr.bf16.mxu0 0
  %136 = vmatpush1.bf16.msra.mxu0 0
  %137 = vmatprep.subr.bf16.mxu0 0
  %138 = vmatpush1.bf16.msra.mxu0 0
  %139 = vmatprep.subr.bf16.mxu0 0
  %140 = vmatpush1.bf16.msra.mxu0 0
  %141 = vmatprep.subr.bf16.mxu0 0
  %142 = vmatpush1.bf16.msra.mxu0 0
  %143 = vmatprep.subr.bf16.mxu0 0
  %144 = vmatpush1.bf16.msra.mxu0 0
  %145 = vmatprep.subr.bf16.mxu0 0
  %146 = vmatpush1.bf16.msra.mxu0 0
  %147 = vmatprep.subr.bf16.mxu0 0
  %148 = vmatpush1.bf16.msra.mxu0 %v82
  %149 = vmatprep.subr.bf16.mxu0 0
  %150 = vmatpush2.bf16.msra.mxu0 0
  %151 = vmatprep.subr.bf16.mxu0 0
  %152 = vmatpush2.bf16.msra.mxu0 0
  %153 = vmatprep.subr.bf16.mxu0 0
  %154 = vmatpush2.bf16.msra.mxu0 0
  %155 = vmatprep.subr.bf16.mxu0 0
  %156 = vmatpush2.bf16.msra.mxu0 0
  %157 = vmatprep.subr.bf16.mxu0 0
  %158 = vmatpush2.bf16.msra.mxu0 0
  %159 = vmatprep.subr.bf16.mxu0 0
  %160 = vmatpush2.bf16.msra.mxu0 0
  %161 = vmatprep.subr.bf16.mxu0 0
  %162 = vmatpush2.bf16.msra.mxu0 0
  %163 = vmatprep.subr.bf16.mxu0 0
  %164 = vmatpush2.bf16.msra.mxu0 0
  %165 = vmatprep.mubr.bf16.mxu0 0
  %166 = vmatmul.mubr.bf16.gmra.mxu0 %v86
  %v167 = vpop.f32.mrf.mxu0
  %v168 = vadd.f32 %v76, %v167
  %v169 = vpop.f32.mrf.mxu0
  %v170 = vpop.f32.mrf.mxu0
  %v171 = vadd.f32 %v76, %v170
  %v172 = vpop.f32.mrf.mxu0
  %173 = vmatprep.mubr.bf16.mxu0 0
  %174 = vmatmul.mubr.bf16.gmra.mxu0 %v89
  %v175 = vpop.f32.mrf.mxu0
  %v176 = vadd.f32 %v76, %v175
  %v177 = vpop.f32.mrf.mxu0
  %v178 = vpop.f32.mrf.mxu0
  %v179 = vadd.f32 %v76, %v178
  %v180 = vpop.f32.mrf.mxu0
  %181 = vmatprep.mubr.bf16.mxu0 0
  %182 = vmatmul.mubr.bf16.gmra.mxu0 %v92
  %v183 = vpop.f32.mrf.mxu0
  %v184 = vadd.f32 %v76, %v183
  %v185 = vpop.f32.mrf.mxu0
  %v186 = vpop.f32.mrf.mxu0
  %v187 = vadd.f32 %v76, %v186
  %v188 = vpop.f32.mrf.mxu0
  %189 = vmatprep.mubr.bf16.mxu0 0
  %190 = vmatmul.mubr.bf16.gmra.mxu0 %v95
  %v191 = vpop.f32.mrf.mxu0
  %v192 = vadd.f32 %v76, %v191
  %v193 = vpop.f32.mrf.mxu0
  %v194 = vpop.f32.mrf.mxu0
  %v195 = vadd.f32 %v76, %v194
  %v196 = vpop.f32.mrf.mxu0
  %197 = vmatprep.mubr.bf16.mxu0 0
  %198 = vmatmul.mubr.bf16.gmra.mxu0 %v98
  %v199 = vpop.f32.mrf.mxu0
  %v200 = vadd.f32 %v76, %v199
  %v201 = vpop.f32.mrf.mxu0
  %v202 = vpop.f32.mrf.mxu0
  %v203 = vadd.f32 %v76, %v202
  %v204 = vpop.f32.mrf.mxu0
  %205 = vmatprep.mubr.bf16.mxu0 0
  %206 = vmatmul.mubr.bf16.gmra.mxu0 %v101
  %v207 = vpop.f32.mrf.mxu0
  %v208 = vadd.f32 %v76, %v207
  %v209 = vpop.f32.mrf.mxu0
  %v210 = vpop.f32.mrf.mxu0
  %v211 = vadd.f32 %v76, %v210
  %v212 = vpop.f32.mrf.mxu0
  %213 = vmatprep.mubr.bf16.mxu0 0
  %214 = vmatmul.mubr.bf16.gmra.mxu0 %v104
  %v215 = vpop.f32.mrf.mxu0
  %v216 = vadd.f32 %v76, %v215
  %v217 = vpop.f32.mrf.mxu0
  %v218 = vpop.f32.mrf.mxu0
  %v219 = vadd.f32 %v76, %v218
  %v220 = vpop.f32.mrf.mxu0
  %221 = vmatprep.mubr.bf16.mxu0 0
  %222 = vmatmul.mubr.bf16.gmra.mxu0 %v107
  %v223 = vpop.f32.mrf.mxu0
  %v224 = vadd.f32 %v76, %v223
  %v225 = vpop.f32.mrf.mxu0
  %v226 = vpop.f32.mrf.mxu0
  %v227 = vadd.f32 %v76, %v226
  %v228 = vpop.f32.mrf.mxu0
  %229 = vmatprep.mubr.bf16.mxu0 0
  %230 = vmatmul.mubr.bf16.gmra.mxu0 %v110
  %v231 = vpop.f32.mrf.mxu0
  %v232 = vadd.f32 %v76, %v231
  %v233 = vpop.f32.mrf.mxu0
  %v234 = vpop.f32.mrf.mxu0
  %v235 = vadd.f32 %v76, %v234
  %v236 = vpop.f32.mrf.mxu0
  %237 = vmatprep.mubr.bf16.mxu0 0
  %238 = vmatmul.mubr.bf16.gmra.mxu0 %v113
  %v239 = vpop.f32.mrf.mxu0
  %v240 = vadd.f32 %v76, %v239
  %v241 = vpop.f32.mrf.mxu0
  %v242 = vpop.f32.mrf.mxu0
  %v243 = vadd.f32 %v76, %v242
  %v244 = vpop.f32.mrf.mxu0
  %245 = vmatprep.mubr.bf16.mxu0 0
  %246 = vmatmul.mubr.bf16.gmra.mxu0 %v116
  %v247 = vpop.f32.mrf.mxu0
  %v248 = vadd.f32 %v76, %v247
  %v249 = vpop.f32.mrf.mxu0
  %v250 = vpop.f32.mrf.mxu0
  %v251 = vadd.f32 %v76, %v250
  %v252 = vpop.f32.mrf.mxu0
  %253 = vmatprep.mubr.bf16.mxu0 0
  %254 = vmatmul.mubr.bf16.gmra.mxu0 %v119
  %v255 = vpop.f32.mrf.mxu0
  %v256 = vadd.f32 %v76, %v255
  %v257 = vpop.f32.mrf.mxu0
  %v258 = vpop.f32.mrf.mxu0
  %v259 = vadd.f32 %v76, %v258
  %v260 = vpop.f32.mrf.mxu0
  %261 = vmatprep.mubr.bf16.mxu0 0
  %262 = vmatmul.mubr.bf16.gmra.mxu0 %v122
  %v263 = vpop.f32.mrf.mxu0
  %v264 = vadd.f32 %v76, %v263
  %v265 = vpop.f32.mrf.mxu0
  %v266 = vpop.f32.mrf.mxu0
  %v267 = vadd.f32 %v76, %v266
  %v268 = vpop.f32.mrf.mxu0
  %269 = vmatprep.mubr.bf16.mxu0 0
  %270 = vmatmul.mubr.bf16.gmra.mxu0 %v125
  %v271 = vpop.f32.mrf.mxu0
  %v272 = vadd.f32 %v76, %v271
  %v273 = vpop.f32.mrf.mxu0
  %v274 = vpop.f32.mrf.mxu0
  %v275 = vadd.f32 %v76, %v274
  %v276 = vpop.f32.mrf.mxu0
  %277 = vmatprep.mubr.bf16.mxu0 0
  %278 = vmatmul.mubr.bf16.gmra.mxu0 %v128
  %v279 = vpop.f32.mrf.mxu0
  %v280 = vadd.f32 %v76, %v279
  %v281 = vpop.f32.mrf.mxu0
  %v282 = vpop.f32.mrf.mxu0
  %v283 = vadd.f32 %v76, %v282
  %v284 = vpop.f32.mrf.mxu0
  %285 = vmatprep.mubr.bf16.mxu0 0
  %286 = vmatmul.mubr.bf16.gmra.mxu0 %v131
  %v287 = vpop.f32.mrf.mxu0
  %v288 = vadd.f32 %v76, %v287
  %v289 = vpop.f32.mrf.mxu0
  %v290 = vpop.f32.mrf.mxu0
  %v291 = vadd.f32 %v76, %v290
  %v292 = vpop.f32.mrf.mxu0
  %293 = vdwg.mxu0
  %v294 = vmax.f32 %v168, 0.0
  %v295 = vmax.f32 %v171, 0.0
  %v296 = vmax.f32 %v176, 0.0
  %v297 = vmax.f32 %v179, 0.0
  %v298 = vmax.f32 %v184, 0.0
  %v299 = vmax.f32 %v187, 0.0
  %v300 = vmax.f32 %v192, 0.0
  %v301 = vmax.f32 %v195, 0.0
  %v302 = vmax.f32 %v200, 0.0
  %v303 = vmax.f32 %v203, 0.0
  %v304 = vmax.f32 %v208, 0.0
  %v305 = vmax.f32 %v211, 0.0
  %v306 = vmax.f32 %v216, 0.0
  %v307 = vmax.f32 %v219, 0.0
  %v308 = vmax.f32 %v224, 0.0
  %v309 = vmax.f32 %v227, 0.0
  %v310 = vmax.f32 %v232, 0.0
  %v311 = vmax.f32 %v235, 0.0
  %v312 = vmax.f32 %v240, 0.0
  %v313 = vmax.f32 %v243, 0.0
  %v314 = vmax.f32 %v248, 0.0
  %v315 = vmax.f32 %v251, 0.0
  %v316 = vmax.f32 %v256, 0.0
  %v317 = vmax.f32 %v259, 0.0
  %v318 = vmax.f32 %v264, 0.0
  %v319 = vmax.f32 %v267, 0.0
  %v320 = vmax.f32 %v272, 0.0
  %v321 = vmax.f32 %v275, 0.0
  %v322 = vmax.f32 %v280, 0.0
  %v323 = vmax.f32 %v283, 0.0
  %v324 = vmax.f32 %v288, 0.0
  %v325 = vmax.f32 %v291, 0.0
  %v326 = vpack.c.bf16 %v295, %v294
  %v327 = vpack.c.bf16 %v297, %v296
  %v328 = vpack.c.bf16 %v299, %v298
  %v329 = vpack.c.bf16 %v301, %v300
  %v330 = vpack.c.bf16 %v303, %v302
  %v331 = vpack.c.bf16 %v305, %v304
  %v332 = vpack.c.bf16 %v307, %v306
  %v333 = vpack.c.bf16 %v309, %v308
  %v334 = vpack.c.bf16 %v311, %v310
  %v335 = vpack.c.bf16 %v313, %v312
  %v336 = vpack.c.bf16 %v315, %v314
  %v337 = vpack.c.bf16 %v317, %v316
  %v338 = vpack.c.bf16 %v319, %v318
  %v339 = vpack.c.bf16 %v321, %v320
  %v340 = vpack.c.bf16 %v323, %v322
  %v341 = vpack.c.bf16 %v325, %v324
  %v342 = vld [vmem:[%s3] sm:$0xf]
  %v343 = vld [vmem:[%s3 + $0x4] sm:$0xf]
  %v344 = vld [vmem:[%s3 + $0x8] sm:$0xf]
  %v345 = vld [vmem:[%s3 + $0xc] sm:$0xf]
  %v346 = vld [vmem:[%s3 + $0x10] sm:$0xf]
  %v347 = vld [vmem:[%s3 + $0x14] sm:$0xf]
  %v348 = vld [vmem:[%s3 + $0x18] sm:$0xf]
  %v349 = vld [vmem:[%s3 + $0x1c] sm:$0xf]
  %v350 = vld [vmem:[%s3 + $0x20] sm:$0xf]
  %v351 = vld [vmem:[%s3 + $0x24] sm:$0xf]
  %v352 = vld [vmem:[%s3 + $0x28] sm:$0xf]
  %v353 = vld [vmem:[%s3 + $0x2c] sm:$0xf]
  %v354 = vld [vmem:[%s3 + $0x30] sm:$0xf]
  %v355 = vld [vmem:[%s3 + $0x34] sm:$0xf]
  %v356 = vld [vmem:[%s3 + $0x38] sm:$0xf]
  %v357 = vld [vmem:[%s3 + $0x3c] sm:$0xf]
  %v358 = vld [vmem:[%s4] sm:$0x1]
  %v360 = vlaneseq
  %v361 = vshrl.u32 %v360, 7
  %v362 = vsub.s32 0, %v361
  %v363 = vrot.slane %v358, %v362
  %v381 = vunpack.c.l.b16 %v342
  %v382 = vunpack.c.l.b16 %v343
  %v383 = vunpack.c.l.b16 %v344
  %v384 = vunpack.c.l.b16 %v345
  %v385 = vunpack.c.l.b16 %v346
  %v386 = vunpack.c.l.b16 %v347
  %v387 = vunpack.c.l.b16 %v348
  %v388 = vunpack.c.l.b16 %v349
  %v389 = vunpack.c.l.b16 %v350
  %v390 = vunpack.c.l.b16 %v351
  %v391 = vunpack.c.l.b16 %v352
  %v392 = vunpack.c.l.b16 %v353
  %v393 = vunpack.c.l.b16 %v354
  %v394 = vunpack.c.l.b16 %v355
  %v395 = vunpack.c.l.b16 %v356
  %v396 = vunpack.c.l.b16 %v357
  %v397 = vpack.c.b16 %v382, %v381
  %v398 = vpack.c.b16 %v384, %v383
  %v399 = vpack.c.b16 %v386, %v385
  %v400 = vpack.c.b16 %v388, %v387
  %v401 = vpack.c.b16 %v390, %v389
  %v402 = vpack.c.b16 %v392, %v391
  %v403 = vpack.c.b16 %v394, %v393
  %v404 = vpack.c.b16 %v396, %v395
  %413 = vmatprep.subr.bf16.mxu0 0
  %414 = vmatpush1.bf16.msra.mxu0 %v404
  %415 = vmatprep.subr.bf16.mxu0 0
  %416 = vmatpush1.bf16.msra.mxu0 %v403
  %417 = vmatprep.subr.bf16.mxu0 0
  %418 = vmatpush1.bf16.msra.mxu0 %v402
  %419 = vmatprep.subr.bf16.mxu0 0
  %420 = vmatpush1.bf16.msra.mxu0 %v401
  %421 = vmatprep.subr.bf16.mxu0 0
  %422 = vmatpush1.bf16.msra.mxu0 %v400
  %423 = vmatprep.subr.bf16.mxu0 0
  %424 = vmatpush1.bf16.msra.mxu0 %v399
  %425 = vmatprep.subr.bf16.mxu0 0
  %426 = vmatpush1.bf16.msra.mxu0 %v398
  %427 = vmatprep.subr.bf16.mxu0 0
  %428 = vmatpush1.bf16.msra.mxu0 %v397
  %429 = vmatprep.subr.bf16.mxu0 0
  %430 = vmatpush2.bf16.msra.mxu0 0
  %431 = vmatprep.subr.bf16.mxu0 0
  %432 = vmatpush2.bf16.msra.mxu0 0
  %433 = vmatprep.subr.bf16.mxu0 0
  %434 = vmatpush2.bf16.msra.mxu0 0
  %435 = vmatprep.subr.bf16.mxu0 0
  %436 = vmatpush2.bf16.msra.mxu0 0
  %437 = vmatprep.subr.bf16.mxu0 0
  %438 = vmatpush2.bf16.msra.mxu0 0
  %439 = vmatprep.subr.bf16.mxu0 0
  %440 = vmatpush2.bf16.msra.mxu0 0
  %441 = vmatprep.subr.bf16.mxu0 0
  %442 = vmatpush2.bf16.msra.mxu0 0
  %443 = vmatprep.subr.bf16.mxu0 0
  %444 = vmatpush2.bf16.msra.mxu0 0
  %445 = vmatprep.mubr.bf16.mxu0 0
  %446 = vmatmul.mubr.bf16.gmra.mxu0 %v326
  %v447 = vpop.f32.mrf.mxu0
  %v448 = vadd.f32 %v363, %v447
  %v449 = vpop.f32.mrf.mxu0
  %v450 = vpop.f32.mrf.mxu0
  %v451 = vadd.f32 %v363, %v450
  %v452 = vpop.f32.mrf.mxu0
  %453 = vmatprep.mubr.bf16.mxu0 0
  %454 = vmatmul.mubr.bf16.gmra.mxu0 %v327
  %v455 = vpop.f32.mrf.mxu0
  %v456 = vadd.f32 %v363, %v455
  %v457 = vpop.f32.mrf.mxu0
  %v458 = vpop.f32.mrf.mxu0
  %v459 = vadd.f32 %v363, %v458
  %v460 = vpop.f32.mrf.mxu0
  %461 = vmatprep.mubr.bf16.mxu0 0
  %462 = vmatmul.mubr.bf16.gmra.mxu0 %v328
  %v463 = vpop.f32.mrf.mxu0
  %v464 = vadd.f32 %v363, %v463
  %v465 = vpop.f32.mrf.mxu0
  %v466 = vpop.f32.mrf.mxu0
  %v467 = vadd.f32 %v363, %v466
  %v468 = vpop.f32.mrf.mxu0
  %469 = vmatprep.mubr.bf16.mxu0 0
  %470 = vmatmul.mubr.bf16.gmra.mxu0 %v329
  %v471 = vpop.f32.mrf.mxu0
  %v472 = vadd.f32 %v363, %v471
  %v473 = vpop.f32.mrf.mxu0
  %v474 = vpop.f32.mrf.mxu0
  %v475 = vadd.f32 %v363, %v474
  %v476 = vpop.f32.mrf.mxu0
  %477 = vmatprep.mubr.bf16.mxu0 0
  %478 = vmatmul.mubr.bf16.gmra.mxu0 %v330
  %v479 = vpop.f32.mrf.mxu0
  %v480 = vadd.f32 %v363, %v479
  %v481 = vpop.f32.mrf.mxu0
  %v482 = vpop.f32.mrf.mxu0
  %v483 = vadd.f32 %v363, %v482
  %v484 = vpop.f32.mrf.mxu0
  %485 = vmatprep.mubr.bf16.mxu0 0
  %486 = vmatmul.mubr.bf16.gmra.mxu0 %v331
  %v487 = vpop.f32.mrf.mxu0
  %v488 = vadd.f32 %v363, %v487
  %v489 = vpop.f32.mrf.mxu0
  %v490 = vpop.f32.mrf.mxu0
  %v491 = vadd.f32 %v363, %v490
  %v492 = vpop.f32.mrf.mxu0
  %493 = vmatprep.mubr.bf16.mxu0 0
  %494 = vmatmul.mubr.bf16.gmra.mxu0 %v332
  %v495 = vpop.f32.mrf.mxu0
  %v496 = vadd.f32 %v363, %v495
  %v497 = vpop.f32.mrf.mxu0
  %v498 = vpop.f32.mrf.mxu0
  %v499 = vadd.f32 %v363, %v498
  %v500 = vpop.f32.mrf.mxu0
  %501 = vmatprep.mubr.bf16.mxu0 0
  %502 = vmatmul.mubr.bf16.gmra.mxu0 %v333
  %v503 = vpop.f32.mrf.mxu0
  %v504 = vadd.f32 %v363, %v503
  %v505 = vpop.f32.mrf.mxu0
  %v506 = vpop.f32.mrf.mxu0
  %v507 = vadd.f32 %v363, %v506
  %v508 = vpop.f32.mrf.mxu0
  %509 = vmatprep.mubr.bf16.mxu0 0
  %510 = vmatmul.mubr.bf16.gmra.mxu0 %v334
  %v511 = vpop.f32.mrf.mxu0
  %v512 = vadd.f32 %v363, %v511
  %v513 = vpop.f32.mrf.mxu0
  %v514 = vpop.f32.mrf.mxu0
  %v515 = vadd.f32 %v363, %v514
  %v516 = vpop.f32.mrf.mxu0
  %517 = vmatprep.mubr.bf16.mxu0 0
  %518 = vmatmul.mubr.bf16.gmra.mxu0 %v335
  %v519 = vpop.f32.mrf.mxu0
  %v520 = vadd.f32 %v363, %v519
  %v521 = vpop.f32.mrf.mxu0
  %v522 = vpop.f32.mrf.mxu0
  %v523 = vadd.f32 %v363, %v522
  %v524 = vpop.f32.mrf.mxu0
  %525 = vmatprep.mubr.bf16.mxu0 0
  %526 = vmatmul.mubr.bf16.gmra.mxu0 %v336
  %v527 = vpop.f32.mrf.mxu0
  %v528 = vadd.f32 %v363, %v527
  %v529 = vpop.f32.mrf.mxu0
  %v530 = vpop.f32.mrf.mxu0
  %v531 = vadd.f32 %v363, %v530
  %v532 = vpop.f32.mrf.mxu0
  %533 = vmatprep.mubr.bf16.mxu0 0
  %534 = vmatmul.mubr.bf16.gmra.mxu0 %v337
  %v535 = vpop.f32.mrf.mxu0
  %v536 = vadd.f32 %v363, %v535
  %v537 = vpop.f32.mrf.mxu0
  %v538 = vpop.f32.mrf.mxu0
  %v539 = vadd.f32 %v363, %v538
  %v540 = vpop.f32.mrf.mxu0
  %541 = vmatprep.mubr.bf16.mxu0 0
  %542 = vmatmul.mubr.bf16.gmra.mxu0 %v338
  %v543 = vpop.f32.mrf.mxu0
  %v544 = vadd.f32 %v363, %v543
  %v545 = vpop.f32.mrf.mxu0
  %v546 = vpop.f32.mrf.mxu0
  %v547 = vadd.f32 %v363, %v546
  %v548 = vpop.f32.mrf.mxu0
  %549 = vmatprep.mubr.bf16.mxu0 0
  %550 = vmatmul.mubr.bf16.gmra.mxu0 %v339
  %v551 = vpop.f32.mrf.mxu0
  %v552 = vadd.f32 %v363, %v551
  %v553 = vpop.f32.mrf.mxu0
  %v554 = vpop.f32.mrf.mxu0
  %v555 = vadd.f32 %v363, %v554
  %v556 = vpop.f32.mrf.mxu0
  %557 = vmatprep.mubr.bf16.mxu0 0
  %558 = vmatmul.mubr.bf16.gmra.mxu0 %v340
  %v559 = vpop.f32.mrf.mxu0
  %v560 = vadd.f32 %v363, %v559
  %v561 = vpop.f32.mrf.mxu0
  %v562 = vpop.f32.mrf.mxu0
  %v563 = vadd.f32 %v363, %v562
  %v564 = vpop.f32.mrf.mxu0
  %565 = vmatprep.mubr.bf16.mxu0 0
  %566 = vmatmul.mubr.bf16.gmra.mxu0 %v341
  %v567 = vpop.f32.mrf.mxu0
  %v568 = vadd.f32 %v363, %v567
  %v569 = vpop.f32.mrf.mxu0
  %v570 = vpop.f32.mrf.mxu0
  %v571 = vadd.f32 %v363, %v570
  %v572 = vpop.f32.mrf.mxu0
  %573 = vdwg.mxu0
  %v574 = vxor.u32 %v448, 2147483648
  %v575 = vxor.u32 %v451, 2147483648
  %v576 = vxor.u32 %v456, 2147483648
  %v577 = vxor.u32 %v459, 2147483648
  %v578 = vxor.u32 %v464, 2147483648
  %v579 = vxor.u32 %v467, 2147483648
  %v580 = vxor.u32 %v472, 2147483648
  %v581 = vxor.u32 %v475, 2147483648
  %v582 = vxor.u32 %v480, 2147483648
  %v583 = vxor.u32 %v483, 2147483648
  %v584 = vxor.u32 %v488, 2147483648
  %v585 = vxor.u32 %v491, 2147483648
  %v586 = vxor.u32 %v496, 2147483648
  %v587 = vxor.u32 %v499, 2147483648
  %v588 = vxor.u32 %v504, 2147483648
  %v589 = vxor.u32 %v507, 2147483648
  %v590 = vxor.u32 %v512, 2147483648
  %v591 = vxor.u32 %v515, 2147483648
  %v592 = vxor.u32 %v520, 2147483648
  %v593 = vxor.u32 %v523, 2147483648
  %v594 = vxor.u32 %v528, 2147483648
  %v595 = vxor.u32 %v531, 2147483648
  %v596 = vxor.u32 %v536, 2147483648
  %v597 = vxor.u32 %v539, 2147483648
  %v598 = vxor.u32 %v544, 2147483648
  %v599 = vxor.u32 %v547, 2147483648
  %v600 = vxor.u32 %v552, 2147483648
  %v601 = vxor.u32 %v555, 2147483648
  %v602 = vxor.u32 %v560, 2147483648
  %v603 = vxor.u32 %v563, 2147483648
  %v604 = vxor.u32 %v568, 2147483648
  %v605 = vxor.u32 %v571, 2147483648
  %v606 = vmul.f32 %v574, 1.442695
  %v607 = vpow.pop %v606
  %v608 = vmul.f32 %v575, 1.442695
  %v609 = vpow.pop %v608
  %v610 = vmul.f32 %v576, 1.442695
  %v611 = vpow.pop %v610
  %v612 = vmul.f32 %v577, 1.442695
  %v613 = vpow.pop %v612
  %v614 = vmul.f32 %v578, 1.442695
  %v615 = vpow.pop %v614
  %v616 = vmul.f32 %v579, 1.442695
  %v617 = vpow.pop %v616
  %v618 = vmul.f32 %v580, 1.442695
  %v619 = vpow.pop %v618
  %v620 = vmul.f32 %v581, 1.442695
  %v621 = vpow.pop %v620
  %v622 = vmul.f32 %v582, 1.442695
  %v623 = vpow.pop %v622
  %v624 = vmul.f32 %v583, 1.442695
  %v625 = vpow.pop %v624
  %v626 = vmul.f32 %v584, 1.442695
  %v627 = vpow.pop %v626
  %v628 = vmul.f32 %v585, 1.442695
  %v629 = vpow.pop %v628
  %v630 = vmul.f32 %v586, 1.442695
  %v631 = vpow.pop %v630
  %v632 = vmul.f32 %v587, 1.442695
  %v633 = vpow.pop %v632
  %v634 = vmul.f32 %v588, 1.442695
  %v635 = vpow.pop %v634
  %v636 = vmul.f32 %v589, 1.442695
  %v637 = vpow.pop %v636
  %v638 = vmul.f32 %v590, 1.442695
  %v639 = vpow.pop %v638
  %v640 = vmul.f32 %v591, 1.442695
  %v641 = vpow.pop %v640
  %v642 = vmul.f32 %v592, 1.442695
  %v643 = vpow.pop %v642
  %v644 = vmul.f32 %v593, 1.442695
  %v645 = vpow.pop %v644
  %v646 = vmul.f32 %v594, 1.442695
  %v647 = vpow.pop %v646
  %v648 = vmul.f32 %v595, 1.442695
  %v649 = vpow.pop %v648
  %v650 = vmul.f32 %v596, 1.442695
  %v651 = vpow.pop %v650
  %v652 = vmul.f32 %v597, 1.442695
  %v653 = vpow.pop %v652
  %v654 = vmul.f32 %v598, 1.442695
  %v655 = vpow.pop %v654
  %v656 = vmul.f32 %v599, 1.442695
  %v657 = vpow.pop %v656
  %v658 = vmul.f32 %v600, 1.442695
  %v659 = vpow.pop %v658
  %v660 = vmul.f32 %v601, 1.442695
  %v661 = vpow.pop %v660
  %v662 = vmul.f32 %v602, 1.442695
  %v663 = vpow.pop %v662
  %v664 = vmul.f32 %v603, 1.442695
  %v665 = vpow.pop %v664
  %v666 = vmul.f32 %v604, 1.442695
  %v667 = vpow.pop %v666
  %v668 = vmul.f32 %v605, 1.442695
  %v669 = vpow.pop %v668
  %v670 = vadd.f32 %v607, 1.0
  %v671 = vadd.f32 %v609, 1.0
  %v672 = vadd.f32 %v611, 1.0
  %v673 = vadd.f32 %v613, 1.0
  %v674 = vadd.f32 %v615, 1.0
  %v675 = vadd.f32 %v617, 1.0
  %v676 = vadd.f32 %v619, 1.0
  %v677 = vadd.f32 %v621, 1.0
  %v678 = vadd.f32 %v623, 1.0
  %v679 = vadd.f32 %v625, 1.0
  %v680 = vadd.f32 %v627, 1.0
  %v681 = vadd.f32 %v629, 1.0
  %v682 = vadd.f32 %v631, 1.0
  %v683 = vadd.f32 %v633, 1.0
  %v684 = vadd.f32 %v635, 1.0
  %v685 = vadd.f32 %v637, 1.0
  %v686 = vadd.f32 %v639, 1.0
  %v687 = vadd.f32 %v641, 1.0
  %v688 = vadd.f32 %v643, 1.0
  %v689 = vadd.f32 %v645, 1.0
  %v690 = vadd.f32 %v647, 1.0
  %v691 = vadd.f32 %v649, 1.0
  %v692 = vadd.f32 %v651, 1.0
  %v693 = vadd.f32 %v653, 1.0
  %v694 = vadd.f32 %v655, 1.0
  %v695 = vadd.f32 %v657, 1.0
  %v696 = vadd.f32 %v659, 1.0
  %v697 = vadd.f32 %v661, 1.0
  %v698 = vadd.f32 %v663, 1.0
  %v699 = vadd.f32 %v665, 1.0
  %v700 = vadd.f32 %v667, 1.0
  %v701 = vadd.f32 %v669, 1.0
  %v702 = vrcp.pop %v670
  %v703 = vmul.f32 1.0, %v702
  %v704 = vrcp.pop %v671
  %v705 = vmul.f32 1.0, %v704
  %v706 = vrcp.pop %v672
  %v707 = vmul.f32 1.0, %v706
  %v708 = vrcp.pop %v673
  %v709 = vmul.f32 1.0, %v708
  %v710 = vrcp.pop %v674
  %v711 = vmul.f32 1.0, %v710
  %v712 = vrcp.pop %v675
  %v713 = vmul.f32 1.0, %v712
  %v714 = vrcp.pop %v676
  %v715 = vmul.f32 1.0, %v714
  %v716 = vrcp.pop %v677
  %v717 = vmul.f32 1.0, %v716
  %v718 = vrcp.pop %v678
  %v719 = vmul.f32 1.0, %v718
  %v720 = vrcp.pop %v679
  %v721 = vmul.f32 1.0, %v720
  %v722 = vrcp.pop %v680
  %v723 = vmul.f32 1.0, %v722
  %v724 = vrcp.pop %v681
  %v725 = vmul.f32 1.0, %v724
  %v726 = vrcp.pop %v682
  %v727 = vmul.f32 1.0, %v726
  %v728 = vrcp.pop %v683
  %v729 = vmul.f32 1.0, %v728
  %v730 = vrcp.pop %v684
  %v731 = vmul.f32 1.0, %v730
  %v732 = vrcp.pop %v685
  %v733 = vmul.f32 1.0, %v732
  %v734 = vrcp.pop %v686
  %v735 = vmul.f32 1.0, %v734
  %v736 = vrcp.pop %v687
  %v737 = vmul.f32 1.0, %v736
  %v738 = vrcp.pop %v688
  %v739 = vmul.f32 1.0, %v738
  %v740 = vrcp.pop %v689
  %v741 = vmul.f32 1.0, %v740
  %v742 = vrcp.pop %v690
  %v743 = vmul.f32 1.0, %v742
  %v744 = vrcp.pop %v691
  %v745 = vmul.f32 1.0, %v744
  %v746 = vrcp.pop %v692
  %v747 = vmul.f32 1.0, %v746
  %v748 = vrcp.pop %v693
  %v749 = vmul.f32 1.0, %v748
  %v750 = vrcp.pop %v694
  %v751 = vmul.f32 1.0, %v750
  %v752 = vrcp.pop %v695
  %v753 = vmul.f32 1.0, %v752
  %v754 = vrcp.pop %v696
  %v755 = vmul.f32 1.0, %v754
  %v756 = vrcp.pop %v697
  %v757 = vmul.f32 1.0, %v756
  %v758 = vrcp.pop %v698
  %v759 = vmul.f32 1.0, %v758
  %v760 = vrcp.pop %v699
  %v761 = vmul.f32 1.0, %v760
  %v762 = vrcp.pop %v700
  %v763 = vmul.f32 1.0, %v762
  %v764 = vrcp.pop %v701
  %v765 = vmul.f32 1.0, %v764
  %v766 = vpack.c.bf16 %v705, %v703
  %v767 = vpack.c.bf16 %v709, %v707
  %v768 = vpack.c.bf16 %v713, %v711
  %v769 = vpack.c.bf16 %v717, %v715
  %v770 = vpack.c.bf16 %v721, %v719
  %v771 = vpack.c.bf16 %v725, %v723
  %v772 = vpack.c.bf16 %v729, %v727
  %v773 = vpack.c.bf16 %v733, %v731
  %v774 = vpack.c.bf16 %v737, %v735
  %v775 = vpack.c.bf16 %v741, %v739
  %v776 = vpack.c.bf16 %v745, %v743
  %v777 = vpack.c.bf16 %v749, %v747
  %v778 = vpack.c.bf16 %v753, %v751
  %v779 = vpack.c.bf16 %v757, %v755
  %v780 = vpack.c.bf16 %v761, %v759
  %v781 = vpack.c.bf16 %v765, %v763
  %v798 = vunpack.c.l.b16 %v766
  %v799 = vunpack.c.h.b16 %v766
  %v800 = vunpack.c.l.b16 %v767
  %v801 = vunpack.c.h.b16 %v767
  %v802 = vunpack.c.l.b16 %v768
  %v803 = vunpack.c.h.b16 %v768
  %v804 = vunpack.c.l.b16 %v769
  %v805 = vunpack.c.h.b16 %v769
  %v806 = vunpack.c.l.b16 %v770
  %v807 = vunpack.c.h.b16 %v770
  %v808 = vunpack.c.l.b16 %v771
  %v809 = vunpack.c.h.b16 %v771
  %v810 = vunpack.c.l.b16 %v772
  %v811 = vunpack.c.h.b16 %v772
  %v812 = vunpack.c.l.b16 %v773
  %v813 = vunpack.c.h.b16 %v773
  %v814 = vunpack.c.l.b16 %v774
  %v815 = vunpack.c.h.b16 %v774
  %v816 = vunpack.c.l.b16 %v775
  %v817 = vunpack.c.h.b16 %v775
  %v818 = vunpack.c.l.b16 %v776
  %v819 = vunpack.c.h.b16 %v776
  %v820 = vunpack.c.l.b16 %v777
  %v821 = vunpack.c.h.b16 %v777
  %v822 = vunpack.c.l.b16 %v778
  %v823 = vunpack.c.h.b16 %v778
  %v824 = vunpack.c.l.b16 %v779
  %v825 = vunpack.c.h.b16 %v779
  %v826 = vunpack.c.l.b16 %v780
  %v827 = vunpack.c.h.b16 %v780
  %v828 = vunpack.c.l.b16 %v781
  %v829 = vunpack.c.h.b16 %v781
  %v830 = vpack.c.b16 %v798, %v798
  %v831 = vpack.c.b16 %v799, %v799
  %v832 = vpack.c.b16 %v800, %v800
  %v833 = vpack.c.b16 %v801, %v801
  %v834 = vpack.c.b16 %v802, %v802
  %v835 = vpack.c.b16 %v803, %v803
  %v836 = vpack.c.b16 %v804, %v804
  %v837 = vpack.c.b16 %v805, %v805
  %v838 = vpack.c.b16 %v806, %v806
  %v839 = vpack.c.b16 %v807, %v807
  %v840 = vpack.c.b16 %v808, %v808
  %v841 = vpack.c.b16 %v809, %v809
  %v842 = vpack.c.b16 %v810, %v810
  %v843 = vpack.c.b16 %v811, %v811
  %v844 = vpack.c.b16 %v812, %v812
  %v845 = vpack.c.b16 %v813, %v813
  %v846 = vpack.c.b16 %v814, %v814
  %v847 = vpack.c.b16 %v815, %v815
  %v848 = vpack.c.b16 %v816, %v816
  %v849 = vpack.c.b16 %v817, %v817
  %v850 = vpack.c.b16 %v818, %v818
  %v851 = vpack.c.b16 %v819, %v819
  %v852 = vpack.c.b16 %v820, %v820
  %v853 = vpack.c.b16 %v821, %v821
  %v854 = vpack.c.b16 %v822, %v822
  %v855 = vpack.c.b16 %v823, %v823
  %v856 = vpack.c.b16 %v824, %v824
  %v857 = vpack.c.b16 %v825, %v825
  %v858 = vpack.c.b16 %v826, %v826
  %v859 = vpack.c.b16 %v827, %v827
  %v860 = vpack.c.b16 %v828, %v828
  %v861 = vpack.c.b16 %v829, %v829
  %894 = vst [vmem:[%s5] sm:$0xf] %v830
  %895 = vst [vmem:[%s5 + $0x4] sm:$0xf] %v831
  %896 = vst [vmem:[%s5 + $0x8] sm:$0xf] %v832
  %897 = vst [vmem:[%s5 + $0xc] sm:$0xf] %v833
  %898 = vst [vmem:[%s5 + $0x10] sm:$0xf] %v834
  %899 = vst [vmem:[%s5 + $0x14] sm:$0xf] %v835
  %900 = vst [vmem:[%s5 + $0x18] sm:$0xf] %v836
  %901 = vst [vmem:[%s5 + $0x1c] sm:$0xf] %v837
  %902 = vst [vmem:[%s5 + $0x20] sm:$0xf] %v838
  %903 = vst [vmem:[%s5 + $0x24] sm:$0xf] %v839
  %904 = vst [vmem:[%s5 + $0x28] sm:$0xf] %v840
  %905 = vst [vmem:[%s5 + $0x2c] sm:$0xf] %v841
  %906 = vst [vmem:[%s5 + $0x30] sm:$0xf] %v842
  %907 = vst [vmem:[%s5 + $0x34] sm:$0xf] %v843
  %908 = vst [vmem:[%s5 + $0x38] sm:$0xf] %v844
  %909 = vst [vmem:[%s5 + $0x3c] sm:$0xf] %v845
  %910 = vst [vmem:[%s5 + $0x40] sm:$0xf] %v846
  %911 = vst [vmem:[%s5 + $0x44] sm:$0xf] %v847
  %912 = vst [vmem:[%s5 + $0x48] sm:$0xf] %v848
  %913 = vst [vmem:[%s5 + $0x4c] sm:$0xf] %v849
  %914 = vst [vmem:[%s5 + $0x50] sm:$0xf] %v850
  %915 = vst [vmem:[%s5 + $0x54] sm:$0xf] %v851
  %916 = vst [vmem:[%s5 + $0x58] sm:$0xf] %v852
  %917 = vst [vmem:[%s5 + $0x5c] sm:$0xf] %v853
  %918 = vst [vmem:[%s5 + $0x60] sm:$0xf] %v854
  %919 = vst [vmem:[%s5 + $0x64] sm:$0xf] %v855
  %920 = vst [vmem:[%s5 + $0x68] sm:$0xf] %v856
  %921 = vst [vmem:[%s5 + $0x6c] sm:$0xf] %v857
  %922 = vst [vmem:[%s5 + $0x70] sm:$0xf] %v858
  %923 = vst [vmem:[%s5 + $0x74] sm:$0xf] %v859
  %924 = vst [vmem:[%s5 + $0x78] sm:$0xf] %v860
  %925 = vst [vmem:[%s5 + $0x7c] sm:$0xf] %v861
  // Predicated region
  $region22: #{generator_forward.1} parent=0 // pred_check
    _
  $region23: #{generator_forward.1} parent=0 // pred_check_branch
    %927 = sbr.rel (0) target = $region25
  $region24: #{generator_forward.1} parent=0 // pred_region
    _
  $region25: #{generator_forward.1} parent=0 // pred_fallthru
    _
  // Predicated region
  $region26: #{generator_forward.1} parent=0 // pred_check
    _
  $region27: #{generator_forward.1} parent=0 // pred_check_branch
    %929 = sbr.rel (0) target = $region29
  $region28: #{generator_forward.1} parent=0 // pred_region
    _
  $region29: #{generator_forward.1} parent=0 // pred_fallthru
    _

</llo_original>
